<compile_context>
chip_gen: v6e
topology: v6e:2x2x1
jax: 0.10.0
libtpu: 0.0.40
codegen_flags: <defaults>
</compile_context>

<pallas_src>
import math
import numpy as np
import jax
import jax.numpy as jnp
from jax.experimental import pallas as pl
from jax.experimental.pallas import tpu as pltpu


# ----------------------- host-side resample matrices (glue) -----------------

def _sinc(x):
    return np.where(x != 0, np.sin(np.pi * x) / (np.pi * x), 1.0)


def _lanczos(x, a):
    cond = np.logical_and(-a < x, x < a)
    out = np.where(cond, _sinc(x) * _sinc(x / a), 0.0)
    return out / out.sum()


def _ramp(ratio, width):
    n = math.ceil(width / ratio + 1)
    out = np.empty(n, dtype=np.float64)
    cur = 0.0
    for i in range(n):
        out[i] = cur
        cur += ratio
    return np.concatenate([-out[1:][::-1], out])[1:-1]


def _reflect_index(p, n):
    if p < 0:
        return -p
    if p >= n:
        return 2 * (n - 1) - p
    return p


def _lanczos_conv_matrix(h, dh):
    """(h, h) matrix equivalent to reflect-pad + 1D cross-correlation with the
    Lanczos kernel used by resample() when downsampling."""
    k = _lanczos(_ramp(dh / h, 2), 2)
    L = k.shape[0]
    pad = (L - 1) // 2
    C = np.zeros((h, h), dtype=np.float64)
    for i in range(h):
        for j in range(L):
            C[i, _reflect_index(i + j - pad, h)] += k[j]
    return C


def _cubic1(x, a):
    return ((a + 2) * x - (a + 3)) * x * x + 1


def _cubic2(x, a):
    return ((a * x - 5 * a) * x + 8 * a) * x - 4 * a


def _bicubic_matrix(h, dh, align_corners=True):
    """(dh, h) matrix for PyTorch bicubic interpolation (A=-0.75) on one axis."""
    a = -0.75
    A = np.zeros((dh, h), dtype=np.float64)
    scale = (h - 1) / (dh - 1) if (align_corners and dh > 1) else 0.0
    for i in range(dh):
        real = i * scale
        ix = int(math.floor(real))
        t = real - ix
        coeffs = (_cubic2(t + 1, a), _cubic1(t, a), _cubic1(1 - t, a), _cubic2(2 - t, a))
        for c, off in zip(coeffs, (-1, 0, 1, 2)):
            A[i, min(max(ix + off, 0), h - 1)] += c
    return A


def _resample_matrix(h, dh):
    """(dh, h) matrix implementing resample() along a single spatial axis."""
    M = _bicubic_matrix(h, dh)
    if dh < h:
        M = M @ _lanczos_conv_matrix(h, dh)
    return M


def _round_up(v, m):
    return ((v + m - 1) // m) * m


# ------------------------------ Pallas kernel --------------------------------

def _cutout_resample_kernel(x_ref, mh_ref, mwt_ref, o_ref):
    # x_ref  : (NC*SH, SW)   all image planes, resident across all cutouts
    # mh_ref : (1, QP, SH)   H-resample matrix (crop offset folded in)
    # mwt_ref: (1, SW, QP)   W-resample matrix, pre-transposed (K, N) layout
    # o_ref  : (1, NC, QP, QP)
    nc = o_ref.shape[1]
    sh = mh_ref.shape[2]

    x2 = x_ref[...]
    mh = mh_ref[0]
    mwt = mwt_ref[0]

    # W-contraction: one big MXU GEMM, M = NC*SH.
    r = jnp.dot(x2, mwt, preferred_element_type=jnp.float32)      # (NC*SH, QP)

    # H-contraction per plane (minor FLOPs term); static unroll, aligned slices.
    for b in range(nc):
        rb = r[b * sh:(b + 1) * sh, :]                             # (SH, QP)
        ob = jnp.dot(mh, rb, preferred_element_type=jnp.float32)   # (QP, QP)
        o_ref[0, b] = ob.astype(o_ref.dtype)


def cutout_resample(x2, mh_all, mwt_all, *, nc, out_dtype):
    """x2: (nc*SH, SW); mh_all: (cutn, QP, SH); mwt_all: (cutn, SW, QP)
    -> (cutn, nc, QP, QP)."""
    cutn, qp, sh = mh_all.shape
    sw = mwt_all.shape[1]
    assert x2.shape == (nc * sh, sw)

    # VMEM budget: image block (fetched once, constant index) + double-buffered
    # matrices + double-buffered output block.  Clamp to 48 MiB so it stays
    # comfortably inside v7x's 64 MiB physical VMEM per TensorCore.
    itemsize = x2.dtype.itemsize
    est = (x2.size * itemsize
           + 2 * (qp * sh + sw * qp) * itemsize
           + 2 * nc * qp * qp * jnp.dtype(out_dtype).itemsize)
    vmem_limit = int(min(max(2 * est, 32 * 1024 * 1024), 48 * 1024 * 1024))

    return pl.pallas_call(
        _cutout_resample_kernel,
        out_shape=jax.ShapeDtypeStruct((cutn, nc, qp, qp), out_dtype),
        grid=(cutn,),
        in_specs=[
            # constant block index -> image DMA'd once, reused for every cutout
            pl.BlockSpec((nc * sh, sw), lambda i: (0, 0)),
            pl.BlockSpec((1, qp, sh), lambda i: (i, 0, 0)),
            pl.BlockSpec((1, sw, qp), lambda i: (i, 0, 0)),
        ],
        out_specs=pl.BlockSpec((1, nc, qp, qp), lambda i: (i, 0, 0, 0)),
        compiler_params=pltpu.CompilerParams(
            dimension_semantics=("parallel",),
            vmem_limit_bytes=vmem_limit),
    )(x2, mh_all, mwt_all)


# ------------------------------ module wrapper --------------------------------

class MakeCutouts:
    def __init__(self, cut_size, cutn, skip_augs=True, compute_dtype=jnp.float32):
        self.cut_size = cut_size
        self.cutn = cutn
        self.skip_augs = skip_augs
        # compute_dtype=jnp.bfloat16 recommended on v6e/v7x (MXU bf16-native,
        # f32 accumulation is kept via preferred_element_type); default f32.
        self.compute_dtype = compute_dtype
        # TODO(synk): torchvision T.Compose random augmentation pipeline
        # (RandomAffine/Perspective/Grayscale + noise) has no clean Pallas
        # equivalent; only the skip_augs=True path is implemented.

    def __call__(self, x, key):
        n, c, h, w = x.shape
        q = self.cut_size
        pad = h // 4                                   # T.Pad(input.shape[2] // 4)
        sideY, sideX = h + 2 * pad, w + 2 * pad
        max_size = min(sideX, sideY)

        nc = n * c
        SH = _round_up(sideY, 8)      # sublane axis of the image planes
        SW = _round_up(sideX, 128)    # lane axis -> unmasked vld/vst
        QP = _round_up(q, 8)

        # ---- batched RNG: two draws, ONE device->host transfer (no per-cutout
        # sync / retrace) -------------------------------------------------------
        kn, ko = jax.random.split(key)
        rnds, uoff = jax.device_get((jax.random.normal(kn, (self.cutn,)),
                                     jax.random.uniform(ko, (self.cutn, 2))))

        mh_rows, mwt_rows = [], []
        for ch in range(self.cutn):
            if ch > self.cutn - self.cutn // 4:
                size_y, size_x, oy, ox = sideY, sideX, 0, 0
            else:
                rnd = min(max(0.8 + 0.3 * float(rnds[ch]), q / max_size), 1.0)
                size = max(int(max_size * rnd), 1)
                size_y = size_x = size
                ox = int(uoff[ch, 0] * abs(sideX - size + 1))
                oy = int(uoff[ch, 1] * abs(sideY - size + 1))

            # Fold crop offsets into the resample matrices (columns outside the
            # crop stay zero -> exact), zero-pad to the aligned frame size.
            mh = np.zeros((QP, SH), np.float32)
            mh[:q, oy:oy + size_y] = _resample_matrix(size_y, q).astype(np.float32)
            mwt = np.zeros((SW, QP), np.float32)
            mwt[ox:ox + size_x, :q] = _resample_matrix(size_x, q).astype(np.float32).T
            mh_rows.append(mh)
            mwt_rows.append(mwt)

        cd = self.compute_dtype
        xp = jnp.pad(x, ((0, 0), (0, 0),
                         (pad, pad + SH - sideY),
                         (pad, pad + SW - sideX)))                 # (N, C, SH, SW)
        x2 = xp.reshape(nc * SH, SW).astype(cd)                    # single image slab
        mh_all = jnp.asarray(np.stack(mh_rows), dtype=cd)          # (cutn, QP, SH)
        mwt_all = jnp.asarray(np.stack(mwt_rows), dtype=cd)        # (cutn, SW, QP)

        out4 = cutout_resample(x2, mh_all, mwt_all, nc=nc, out_dtype=x.dtype)
        out = out4[:, :, :q, :q]                                   # (cutn, NC, Q, Q)
        out = out.reshape(self.cutn, n, c, q, q).reshape(self.cutn * n, c, q, q)
        return out, (x2, mh_all, mwt_all)


# ------------------------------------ main ------------------------------------

if __name__ == "__main__":
    key = jax.random.PRNGKey(0)
    kx, kc = jax.random.split(key)
    n, c, h, w = 2, 4, 16, 16
    x = jax.random.normal(kx, (n, c, h, w), dtype=jnp.float32)

    mc = MakeCutouts(cut_size=8, cutn=8, skip_augs=True)
    out, (x2, mh_all, mwt_all) = mc(x, kc)
    out = jax.block_until_ready(out)
    q = 8
    assert out.shape == (8 * n, c, q, q) and out.dtype == jnp.float32

    # plain-JAX reference for the kernel's hot path (same matrices, same data)
    nc = n * c
    qp, sh = mh_all.shape[1], mh_all.shape[2]
    sw = mwt_all.shape[1]
    planes = x2.reshape(nc, sh, sw).astype(jnp.float32)
    tmp = jnp.einsum('kqh,bhw->kbqw', mh_all.astype(jnp.float32), planes,
                     precision=jax.lax.Precision.HIGHEST)
    ref = jnp.einsum('kbqw,kwp->kbqp', tmp, mwt_all.astype(jnp.float32),
                     precision=jax.lax.Precision.HIGHEST)
    ref = ref[:, :, :q, :q].reshape(8, n, c, q, q).reshape(8 * n, c, q, q)
    err = float(jnp.max(jnp.abs(out - ref)))
    assert err < 1e-4, f"mismatch vs reference: {err}"

    print("KERNEL_OK")
</pallas_src>

<mosaic_0001>
module attributes {stable_mosaic.version = 11 : i64} {
  func.func @_cutout_resample_kernel(%arg0: i32, %arg1: memref<192x128xf32, #tpu.memory_space<vmem>>, %arg2: memref<1x8x24xf32, #tpu.memory_space<vmem>>, %arg3: memref<1x128x8xf32, #tpu.memory_space<vmem>>, %arg4: memref<1x8x8x8xf32, #tpu.memory_space<vmem>>) attributes {dimension_semantics = [#tpu.dimension_semantics<parallel>], iteration_bounds = array<i64: 8>, scalar_prefetch = 0 : i64, scratch_operands = 0 : i64, tpu.core_type = #tpu.core_type<tc>, window_params = [{pipeline_mode = #tpu.pipeline_mode<synchronous>, transform_indices = @transform_0, window_bounds = array<i64: 192, 128>}, {transform_indices = @transform_1, window_bounds = array<i64: 1, 8, 24>}, {transform_indices = @transform_2, window_bounds = array<i64: 1, 128, 8>}, {transform_indices = @transform_3, window_bounds = array<i64: 1, 8, 8, 8>}]} {
    %c0 = arith.constant 0 : index
    %c0_0 = arith.constant 0 : index
    %0 = vector.load %arg1[%c0, %c0_0] : memref<192x128xf32, #tpu.memory_space<vmem>>, vector<192x128xf32>
    %c0_1 = arith.constant 0 : index
    %c0_2 = arith.constant 0 : index
    %c0_3 = arith.constant 0 : index
    %1 = vector.load %arg2[%c0_1, %c0_2, %c0_3] : memref<1x8x24xf32, #tpu.memory_space<vmem>>, vector<1x8x24xf32>
    %2 = vector.shape_cast %1 : vector<1x8x24xf32> to vector<8x24xf32>
    %c0_4 = arith.constant 0 : index
    %c0_5 = arith.constant 0 : index
    %c0_6 = arith.constant 0 : index
    %3 = vector.load %arg3[%c0_4, %c0_5, %c0_6] : memref<1x128x8xf32, #tpu.memory_space<vmem>>, vector<1x128x8xf32>
    %4 = vector.shape_cast %3 : vector<1x128x8xf32> to vector<128x8xf32>
    %cst = arith.constant dense<0.000000e+00> : vector<192x8xf32>
    %5 = tpu.matmul %0, %4, %cst {dimension_numbers = #tpu.dot_dimension_numbers<[1], [0], [0], [1], [0, 0, 1, 1], [], []>} : vector<192x128xf32>, vector<128x8xf32>, vector<192x8xf32> -> vector<192x8xf32>
    %6 = vector.extract_strided_slice %5 {offsets = [0, 0], sizes = [24, 8], strides = [1, 1]} : vector<192x8xf32> to vector<24x8xf32>
    %cst_7 = arith.constant dense<0.000000e+00> : vector<8x8xf32>
    %7 = tpu.matmul %2, %6, %cst_7 {dimension_numbers = #tpu.dot_dimension_numbers<[1], [0], [0], [1], [0, 0, 1, 1], [], []>} : vector<8x24xf32>, vector<24x8xf32>, vector<8x8xf32> -> vector<8x8xf32>
    %c0_8 = arith.constant 0 : index
    %c0_9 = arith.constant 0 : index
    %c0_10 = arith.constant 0 : index
    %c0_11 = arith.constant 0 : index
    %8 = vector.load %arg4[%c0_8, %c0_9, %c0_10, %c0_11] : memref<1x8x8x8xf32, #tpu.memory_space<vmem>>, vector<1x1x8x8xf32>
    %9 = vector.shape_cast %8 : vector<1x1x8x8xf32> to vector<8x8xf32>
    %10 = vector.shape_cast %7 : vector<8x8xf32> to vector<1x1x8x8xf32>
    tpu.vector_store %arg4[%c0_8, %c0_9, %c0_10, %c0_11], %10 {strides = array<i32>} : memref<1x8x8x8xf32, #tpu.memory_space<vmem>>, vector<1x1x8x8xf32>,
    %11 = vector.extract_strided_slice %5 {offsets = [24, 0], sizes = [24, 8], strides = [1, 1]} : vector<192x8xf32> to vector<24x8xf32>
    %cst_12 = arith.constant dense<0.000000e+00> : vector<8x8xf32>
    %12 = tpu.matmul %2, %11, %cst_12 {dimension_numbers = #tpu.dot_dimension_numbers<[1], [0], [0], [1], [0, 0, 1, 1], [], []>} : vector<8x24xf32>, vector<24x8xf32>, vector<8x8xf32> -> vector<8x8xf32>
    %c0_13 = arith.constant 0 : index
    %c1 = arith.constant 1 : index
    %c0_14 = arith.constant 0 : index
    %c0_15 = arith.constant 0 : index
    %13 = vector.load %arg4[%c0_13, %c1, %c0_14, %c0_15] : memref<1x8x8x8xf32, #tpu.memory_space<vmem>>, vector<1x1x8x8xf32>
    %14 = vector.shape_cast %13 : vector<1x1x8x8xf32> to vector<8x8xf32>
    %15 = vector.shape_cast %12 : vector<8x8xf32> to vector<1x1x8x8xf32>
    tpu.vector_store %arg4[%c0_13, %c1, %c0_14, %c0_15], %15 {strides = array<i32>} : memref<1x8x8x8xf32, #tpu.memory_space<vmem>>, vector<1x1x8x8xf32>,
    %16 = vector.extract_strided_slice %5 {offsets = [48, 0], sizes = [24, 8], strides = [1, 1]} : vector<192x8xf32> to vector<24x8xf32>
    %cst_16 = arith.constant dense<0.000000e+00> : vector<8x8xf32>
    %17 = tpu.matmul %2, %16, %cst_16 {dimension_numbers = #tpu.dot_dimension_numbers<[1], [0], [0], [1], [0, 0, 1, 1], [], []>} : vector<8x24xf32>, vector<24x8xf32>, vector<8x8xf32> -> vector<8x8xf32>
    %c0_17 = arith.constant 0 : index
    %c2 = arith.constant 2 : index
    %c0_18 = arith.constant 0 : index
    %c0_19 = arith.constant 0 : index
    %18 = vector.load %arg4[%c0_17, %c2, %c0_18, %c0_19] : memref<1x8x8x8xf32, #tpu.memory_space<vmem>>, vector<1x1x8x8xf32>
    %19 = vector.shape_cast %18 : vector<1x1x8x8xf32> to vector<8x8xf32>
    %20 = vector.shape_cast %17 : vector<8x8xf32> to vector<1x1x8x8xf32>
    tpu.vector_store %arg4[%c0_17, %c2, %c0_18, %c0_19], %20 {strides = array<i32>} : memref<1x8x8x8xf32, #tpu.memory_space<vmem>>, vector<1x1x8x8xf32>,
    %21 = vector.extract_strided_slice %5 {offsets = [72, 0], sizes = [24, 8], strides = [1, 1]} : vector<192x8xf32> to vector<24x8xf32>
    %cst_20 = arith.constant dense<0.000000e+00> : vector<8x8xf32>
    %22 = tpu.matmul %2, %21, %cst_20 {dimension_numbers = #tpu.dot_dimension_numbers<[1], [0], [0], [1], [0, 0, 1, 1], [], []>} : vector<8x24xf32>, vector<24x8xf32>, vector<8x8xf32> -> vector<8x8xf32>
    %c0_21 = arith.constant 0 : index
    %c3 = arith.constant 3 : index
    %c0_22 = arith.constant 0 : index
    %c0_23 = arith.constant 0 : index
    %23 = vector.load %arg4[%c0_21, %c3, %c0_22, %c0_23] : memref<1x8x8x8xf32, #tpu.memory_space<vmem>>, vector<1x1x8x8xf32>
    %24 = vector.shape_cast %23 : vector<1x1x8x8xf32> to vector<8x8xf32>
    %25 = vector.shape_cast %22 : vector<8x8xf32> to vector<1x1x8x8xf32>
    tpu.vector_store %arg4[%c0_21, %c3, %c0_22, %c0_23], %25 {strides = array<i32>} : memref<1x8x8x8xf32, #tpu.memory_space<vmem>>, vector<1x1x8x8xf32>,
    %26 = vector.extract_strided_slice %5 {offsets = [96, 0], sizes = [24, 8], strides = [1, 1]} : vector<192x8xf32> to vector<24x8xf32>
    %cst_24 = arith.constant dense<0.000000e+00> : vector<8x8xf32>
    %27 = tpu.matmul %2, %26, %cst_24 {dimension_numbers = #tpu.dot_dimension_numbers<[1], [0], [0], [1], [0, 0, 1, 1], [], []>} : vector<8x24xf32>, vector<24x8xf32>, vector<8x8xf32> -> vector<8x8xf32>
    %c0_25 = arith.constant 0 : index
    %c4 = arith.constant 4 : index
    %c0_26 = arith.constant 0 : index
    %c0_27 = arith.constant 0 : index
    %28 = vector.load %arg4[%c0_25, %c4, %c0_26, %c0_27] : memref<1x8x8x8xf32, #tpu.memory_space<vmem>>, vector<1x1x8x8xf32>
    %29 = vector.shape_cast %28 : vector<1x1x8x8xf32> to vector<8x8xf32>
    %30 = vector.shape_cast %27 : vector<8x8xf32> to vector<1x1x8x8xf32>
    tpu.vector_store %arg4[%c0_25, %c4, %c0_26, %c0_27], %30 {strides = array<i32>} : memref<1x8x8x8xf32, #tpu.memory_space<vmem>>, vector<1x1x8x8xf32>,
    %31 = vector.extract_strided_slice %5 {offsets = [120, 0], sizes = [24, 8], strides = [1, 1]} : vector<192x8xf32> to vector<24x8xf32>
    %cst_28 = arith.constant dense<0.000000e+00> : vector<8x8xf32>
    %32 = tpu.matmul %2, %31, %cst_28 {dimension_numbers = #tpu.dot_dimension_numbers<[1], [0], [0], [1], [0, 0, 1, 1], [], []>} : vector<8x24xf32>, vector<24x8xf32>, vector<8x8xf32> -> vector<8x8xf32>
    %c0_29 = arith.constant 0 : index
    %c5 = arith.constant 5 : index
    %c0_30 = arith.constant 0 : index
    %c0_31 = arith.constant 0 : index
    %33 = vector.load %arg4[%c0_29, %c5, %c0_30, %c0_31] : memref<1x8x8x8xf32, #tpu.memory_space<vmem>>, vector<1x1x8x8xf32>
    %34 = vector.shape_cast %33 : vector<1x1x8x8xf32> to vector<8x8xf32>
    %35 = vector.shape_cast %32 : vector<8x8xf32> to vector<1x1x8x8xf32>
    tpu.vector_store %arg4[%c0_29, %c5, %c0_30, %c0_31], %35 {strides = array<i32>} : memref<1x8x8x8xf32, #tpu.memory_space<vmem>>, vector<1x1x8x8xf32>,
    %36 = vector.extract_strided_slice %5 {offsets = [144, 0], sizes = [24, 8], strides = [1, 1]} : vector<192x8xf32> to vector<24x8xf32>
    %cst_32 = arith.constant dense<0.000000e+00> : vector<8x8xf32>
    %37 = tpu.matmul %2, %36, %cst_32 {dimension_numbers = #tpu.dot_dimension_numbers<[1], [0], [0], [1], [0, 0, 1, 1], [], []>} : vector<8x24xf32>, vector<24x8xf32>, vector<8x8xf32> -> vector<8x8xf32>
    %c0_33 = arith.constant 0 : index
    %c6 = arith.constant 6 : index
    %c0_34 = arith.constant 0 : index
    %c0_35 = arith.constant 0 : index
    %38 = vector.load %arg4[%c0_33, %c6, %c0_34, %c0_35] : memref<1x8x8x8xf32, #tpu.memory_space<vmem>>, vector<1x1x8x8xf32>
    %39 = vector.shape_cast %38 : vector<1x1x8x8xf32> to vector<8x8xf32>
    %40 = vector.shape_cast %37 : vector<8x8xf32> to vector<1x1x8x8xf32>
    tpu.vector_store %arg4[%c0_33, %c6, %c0_34, %c0_35], %40 {strides = array<i32>} : memref<1x8x8x8xf32, #tpu.memory_space<vmem>>, vector<1x1x8x8xf32>,
    %41 = vector.extract_strided_slice %5 {offsets = [168, 0], sizes = [24, 8], strides = [1, 1]} : vector<192x8xf32> to vector<24x8xf32>
    %cst_36 = arith.constant dense<0.000000e+00> : vector<8x8xf32>
    %42 = tpu.matmul %2, %41, %cst_36 {dimension_numbers = #tpu.dot_dimension_numbers<[1], [0], [0], [1], [0, 0, 1, 1], [], []>} : vector<8x24xf32>, vector<24x8xf32>, vector<8x8xf32> -> vector<8x8xf32>
    %c0_37 = arith.constant 0 : index
    %c7 = arith.constant 7 : index
    %c0_38 = arith.constant 0 : index
    %c0_39 = arith.constant 0 : index
    %43 = vector.load %arg4[%c0_37, %c7, %c0_38, %c0_39] : memref<1x8x8x8xf32, #tpu.memory_space<vmem>>, vector<1x1x8x8xf32>
    %44 = vector.shape_cast %43 : vector<1x1x8x8xf32> to vector<8x8xf32>
    %45 = vector.shape_cast %42 : vector<8x8xf32> to vector<1x1x8x8xf32>
    tpu.vector_store %arg4[%c0_37, %c7, %c0_38, %c0_39], %45 {strides = array<i32>} : memref<1x8x8x8xf32, #tpu.memory_space<vmem>>, vector<1x1x8x8xf32>,
    return
  }
  func.func @transform_0(%arg0: i32) -> (i32, i32) {
    %c0_i32 = arith.constant 0 : i32
    %c0_i32_0 = arith.constant 0 : i32
    %c0_i32_1 = arith.constant 0 : i32
    return %c0_i32, %c0_i32_0 : i32, i32
  }
  func.func @transform_1(%arg0: i32) -> (i32, i32, i32) {
    %c0_i32 = arith.constant 0 : i32
    %c0_i32_0 = arith.constant 0 : i32
    %c0_i32_1 = arith.constant 0 : i32
    return %arg0, %c0_i32, %c0_i32_0 : i32, i32, i32
  }
  func.func @transform_2(%arg0: i32) -> (i32, i32, i32) {
    %c0_i32 = arith.constant 0 : i32
    %c0_i32_0 = arith.constant 0 : i32
    %c0_i32_1 = arith.constant 0 : i32
    return %arg0, %c0_i32, %c0_i32_0 : i32, i32, i32
  }
  func.func @transform_3(%arg0: i32) -> (i32, i32, i32, i32) {
    %c0_i32 = arith.constant 0 : i32
    %c0_i32_0 = arith.constant 0 : i32
    %c0_i32_1 = arith.constant 0 : i32
    %c0_i32_2 = arith.constant 0 : i32
    return %arg0, %c0_i32, %c0_i32_0, %c0_i32_1 : i32, i32, i32, i32
  }
}

</mosaic_0001>

<llo_original>
// kernel: tpu_custom_call.1
$region0: #{tpu_custom_call.1}
  #allocation0 [shape = 'u32[]', space=smem, size = 0x4, offset = 0x4, fixed_abs, tag = 'smem constant byte address 0x4 - core index']
  #allocation1 [shape = 'u32[144,128]{1,0:T(1,128)}', space=vmem, size = 0x12000, scoped, tag = 'internal scratch']
  %s0 = inlined_call_operand.vmem [shape: f32[192,128], index: 0, kind: input, shape index: {}]
  %s1 = inlined_call_operand.vmem [shape: f32[8,8,24], index: 1, kind: input, shape index: {}]
  %s2 = inlined_call_operand.vmem [shape: f32[8,128,8], index: 2, kind: input, shape index: {}]
  %s3 = inlined_call_operand.hbm [shape: f32[8,8,8,8], index: 3, kind: output, shape index: {}]
  %s4 = sld [smem:[#allocation0]]
  $region45: #{tpu_custom_call.1} parent=0
    _
  %s6 = ssub.s32 1, %s4
  %s7 = scalar_select 0, %s6, %s4
  $region1: #{tpu_custom_call.1} parent=0
    #allocation2 [shape = 'u8[65536]{0}', space=vmem, size = 0x10000, scoped, tag = 'output window, operand 0']
    #allocation3 [shape = 's32[2]{0}', space=sflag, size = 0x8, scoped, tag = 'scoped memory for tpu_custom_call.1']
    %8 = vsyncpa [#allocation3], 0
    %s9 = scalar_lea.sflag [#allocation3], 1
    %10 = vsyncpa %s9, 0
    loop: start=0, step=1, limit=10
    $region2: #{tpu_custom_call.1} parent=1 // loop_pre_header
      _
    $region3: #{tpu_custom_call.1} parent=1 // loop_header
      %s12 = sphi 0, %s16
      %p13 = scmp.ge.s32.totalorder %s12, 10
      %s20 = sphi 0, %s20
      %s22 = sphi 0, %s20
      %s23 = sphi 0, %s22
      %s37 = sphi 0, %s23
      %s43 = sphi 0, %s45
      %s46 = sphi 0, %s43
      %s47 = sphi 0, %s46
      %s63 = sphi 0, %s47
      %s69 = sphi 0, %s71
      %s72 = sphi 0, %s69
      %s73 = sphi 0, %s72
      %s89 = sphi 0, %s73
      %s95 = sphi 0, %s97
      %s98 = sphi 0, %s95
      %s99 = sphi 0, %s98
      %s115 = sphi 0, %s99
    $region4: #{tpu_custom_call.1} parent=1 // loop_header_branch
      %15 = sbr.rel (%p13) target = $region8
    $region5: #{tpu_custom_call.1} parent=1 // loop_body
      %s17 = ssub.s32 %s12, 1
      %s18 = ssub.s32 %s12, 2
      %s19 = sadd.s32 %s12, 1
      %s21 = sadd.s32 %s20, 1
      %p24 = scmp.eq.s32.totalorder %s12, 7
      %p25 = scmp.ne.s32.totalorder %s20, %s22
      %p26 = scmp.eq.s32.totalorder %s12, 0
      %p27 = por %p25, %p26
      %p28 = scmp.ne.s32.totalorder %s20, %s22
      %p29 = scmp.eq.s32.totalorder %s17, 7
      %p30 = por %p28, %p29
      %p31 = scmp.ne.s32.totalorder %s22, %s23
      %p32 = scmp.eq.s32.totalorder %s17, 0
      %p33 = por %p31, %p32
      %p34 = scmp.ne.s32.totalorder %s22, %s23
      %p35 = scmp.eq.s32.totalorder %s18, 7
      %p36 = por %p34, %p35
      %p38 = scmp.ne.s32.totalorder %s23, %s37
      %p39 = scmp.eq.s32.totalorder %s18, 0
      %p40 = por %p38, %p39
      %s41 = ssub.s32 %s12, %s19
      %p42 = scmp.eq.s32.totalorder %s41, 0
      %s44 = sadd.s32 %s43, 1
      %s45 = scalar_select %p42, %s43, %s44
      %p48 = pneg %p42
      %p49 = scmp.eq.s32.totalorder %s12, 7
      %p50 = por %p48, %p49
      %p51 = scmp.ne.s32.totalorder %s43, %s46
      %p52 = scmp.eq.s32.totalorder %s12, 0
      %p53 = por %p51, %p52
      %p54 = scmp.ne.s32.totalorder %s43, %s46
      %p55 = scmp.eq.s32.totalorder %s17, 7
      %p56 = por %p54, %p55
      %p57 = scmp.ne.s32.totalorder %s46, %s47
      %p58 = scmp.eq.s32.totalorder %s17, 0
      %p59 = por %p57, %p58
      %p60 = scmp.ne.s32.totalorder %s46, %s47
      %p61 = scmp.eq.s32.totalorder %s18, 7
      %p62 = por %p60, %p61
      %p64 = scmp.ne.s32.totalorder %s47, %s63
      %p65 = scmp.eq.s32.totalorder %s18, 0
      %p66 = por %p64, %p65
      %s67 = ssub.s32 %s12, %s19
      %p68 = scmp.eq.s32.totalorder %s67, 0
      %s70 = sadd.s32 %s69, 1
      %s71 = scalar_select %p68, %s69, %s70
      %p74 = pneg %p68
      %p75 = scmp.eq.s32.totalorder %s12, 7
      %p76 = por %p74, %p75
      %p77 = scmp.ne.s32.totalorder %s69, %s72
      %p78 = scmp.eq.s32.totalorder %s12, 0
      %p79 = por %p77, %p78
      %p80 = scmp.ne.s32.totalorder %s69, %s72
      %p81 = scmp.eq.s32.totalorder %s17, 7
      %p82 = por %p80, %p81
      %p83 = scmp.ne.s32.totalorder %s72, %s73
      %p84 = scmp.eq.s32.totalorder %s17, 0
      %p85 = por %p83, %p84
      %p86 = scmp.ne.s32.totalorder %s72, %s73
      %p87 = scmp.eq.s32.totalorder %s18, 7
      %p88 = por %p86, %p87
      %p90 = scmp.ne.s32.totalorder %s73, %s89
      %p91 = scmp.eq.s32.totalorder %s18, 0
      %p92 = por %p90, %p91
      %s93 = ssub.s32 %s12, %s19
      %p94 = scmp.eq.s32.totalorder %s93, 0
      %s96 = sadd.s32 %s95, 1
      %s97 = scalar_select %p94, %s95, %s96
      %p100 = pneg %p94
      %p101 = scmp.eq.s32.totalorder %s12, 7
      %p102 = por %p100, %p101
      %p103 = scmp.ne.s32.totalorder %s95, %s98
      %p104 = scmp.eq.s32.totalorder %s12, 0
      %p105 = por %p103, %p104
      %p106 = scmp.ne.s32.totalorder %s95, %s98
      %p107 = scmp.eq.s32.totalorder %s17, 7
      %p108 = por %p106, %p107
      %p109 = scmp.ne.s32.totalorder %s98, %s99
      %p110 = scmp.eq.s32.totalorder %s17, 0
      %p111 = por %p109, %p110
      %p112 = scmp.ne.s32.totalorder %s98, %s99
      %p113 = scmp.eq.s32.totalorder %s18, 7
      %p114 = por %p112, %p113
      %p116 = scmp.ne.s32.totalorder %s99, %s115
      %p117 = scmp.eq.s32.totalorder %s18, 0
      %p118 = por %p116, %p117
      %p119 = scmp.le.s32.totalorder 1, %s12
      %p120 = scmp.lt.s32.totalorder %s12, 9
      %p121 = pnand %p119, %p120
      %p122 = pneg %p121
      // Predicated region
      $region9: #{tpu_custom_call.1} parent=5 // pred_check
        _
      $region10: #{tpu_custom_call.1} parent=5 // pred_check_branch
        %124 = sbr.rel (%p121) target = $region12
      $region11: #{tpu_custom_call.1} parent=5 // pred_region
        %s125 = ssub.s32 %s12, 1
        // Predicated region
        $region13: #{tpu_custom_call.1} parent=11 // pred_check
          %p126 = pneg %p33
        $region14: #{tpu_custom_call.1} parent=11 // pred_check_branch
          %128 = sbr.rel (%p126) target = $region16
        $region15: #{tpu_custom_call.1} parent=11 // pred_region
          _
        $region16: #{tpu_custom_call.1} parent=11 // pred_fallthru
          _
      $region12: #{tpu_custom_call.1} parent=5 // pred_fallthru
        _
      %p129 = scmp.lt.s32.totalorder %s12, 8
      // Predicated region
      $region17: #{tpu_custom_call.1} parent=5 // pred_check
        %p130 = pneg %p129
      $region18: #{tpu_custom_call.1} parent=5 // pred_check_branch
        %132 = sbr.rel (%p130) target = $region20
      $region19: #{tpu_custom_call.1} parent=5 // pred_region
        // Predicated region
        $region21: #{tpu_custom_call.1} parent=19 // pred_check
          %p133 = pneg %p53
        $region22: #{tpu_custom_call.1} parent=19 // pred_check_branch
          %135 = sbr.rel (%p133) target = $region24
        $region23: #{tpu_custom_call.1} parent=19 // pred_region
          %p136 = scmp.lt.s32.totalorder %s12, 7
          %s137 = scalar_select %p136, %s12, 7
          %s138 = smul.addr %s137, 8
          %s139 = scalar_lea.vmem %s1, %s138
        $region24: #{tpu_custom_call.1} parent=19 // pred_fallthru
          _
        // Predicated region
        $region25: #{tpu_custom_call.1} parent=19 // pred_check
          %p140 = pneg %p79
        $region26: #{tpu_custom_call.1} parent=19 // pred_check_branch
          %142 = sbr.rel (%p140) target = $region28
        $region27: #{tpu_custom_call.1} parent=19 // pred_region
          %p143 = scmp.lt.s32.totalorder %s12, 7
          %s144 = scalar_select %p143, %s12, 7
          %s145 = smul.addr %s144, 16
          %s146 = smul.addr %s145, 8
          %s147 = scalar_lea.vmem %s2, %s146
        $region28: #{tpu_custom_call.1} parent=19 // pred_fallthru
          _
      $region20: #{tpu_custom_call.1} parent=5 // pred_fallthru
        _
      %p148 = scmp.le.s32.totalorder 1, %s12
      %p149 = scmp.lt.s32.totalorder %s12, 9
      %p150 = pnand %p148, %p149
      %p151 = pneg %p150
      // Predicated region
      $region29: #{tpu_custom_call.1} parent=5 // pred_check
        _
      $region30: #{tpu_custom_call.1} parent=5 // pred_check_branch
        %153 = sbr.rel (%p150) target = $region32
      $region31: #{tpu_custom_call.1} parent=5 // pred_region
        %s154 = ssub.s32 %s12, 1
        %p155 = pneg %p33
        %p156 = pneg %p30
        %p157 = scmp.lt.s32.totalorder %s17, 7
        %s158 = scalar_select %p157, %s17, 7
        %s159 = smul.addr %s158, 8
        %s160 = scalar_lea.vmem %s1, %s159
        %p161 = pneg %p59
        %p162 = pneg %p56
        %p163 = scmp.lt.s32.totalorder %s17, 7
        %s164 = scalar_select %p163, %s17, 7
        %s165 = smul.addr %s164, 16
        %s166 = smul.addr %s165, 8
        %s167 = scalar_lea.vmem %s2, %s166
        %p168 = pneg %p85
        %p169 = pneg %p82
        %p170 = pneg %p111
        %p171 = pneg %p108
        %s172 = sand.u32 %s98, 1
        %s173 = scalar_lea.sflag [#allocation3], %s172
        %s174 = sand.u32 %s98, 1
        %s175 = smul.addr %s174, 64
        %s176 = scalar_lea.vmem [#allocation2], %s175
        %p177 = scmp.lt.s32.totalorder %s17, 7
        %s178 = scalar_select %p177, %s17, 7
        %s179 = smul.addr %s178, 8
        %s180 = scalar_lea.vmem %s1, %s179
        %p181 = scmp.lt.s32.totalorder %s17, 7
        %s182 = scalar_select %p181, %s17, 7
        %s183 = smul.addr %s182, 16
        %s184 = smul.addr %s183, 8
        %s185 = scalar_lea.vmem %s2, %s184
        %v186 = vld [vmem:[%s0] sm:$0xff]
        %v187 = vld [vmem:[%s0 + $0x8] sm:$0xff]
        %v188 = vld [vmem:[%s0 + $0x10] sm:$0xff]
        %v189 = vld [vmem:[%s0 + $0x18] sm:$0xff]
        %v190 = vld [vmem:[%s0 + $0x20] sm:$0xff]
        %v191 = vld [vmem:[%s0 + $0x28] sm:$0xff]
        %v192 = vld [vmem:[%s0 + $0x30] sm:$0xff]
        %v193 = vld [vmem:[%s0 + $0x38] sm:$0xff]
        %v194 = vld [vmem:[%s0 + $0x40] sm:$0xff]
        %v195 = vld [vmem:[%s0 + $0x48] sm:$0xff]
        %v196 = vld [vmem:[%s0 + $0x50] sm:$0xff]
        %v197 = vld [vmem:[%s0 + $0x58] sm:$0xff]
        %v198 = vld [vmem:[%s0 + $0x60] sm:$0xff]
        %v199 = vld [vmem:[%s0 + $0x68] sm:$0xff]
        %v200 = vld [vmem:[%s0 + $0x70] sm:$0xff]
        %v201 = vld [vmem:[%s0 + $0x78] sm:$0xff]
        %v202 = vld [vmem:[%s0 + $0x80] sm:$0xff]
        %v203 = vld [vmem:[%s0 + $0x88] sm:$0xff]
        %v204 = vld [vmem:[%s0 + $0x90] sm:$0xff]
        %v205 = vld [vmem:[%s0 + $0x98] sm:$0xff]
        %v206 = vld [vmem:[%s0 + $0xa0] sm:$0xff]
        %v207 = vld [vmem:[%s0 + $0xa8] sm:$0xff]
        %v208 = vld [vmem:[%s0 + $0xb0] sm:$0xff]
        %v209 = vld [vmem:[%s0 + $0xb8] sm:$0xff]
        %v210 = vld [vmem:[%s180] sm:$0xff]
        %v211 = vld [vmem:[%s185] sm:$0xff]
        %v212 = vld [vmem:[%s185 + $0x8] sm:$0xff]
        %v213 = vld [vmem:[%s185 + $0x10] sm:$0xff]
        %v214 = vld [vmem:[%s185 + $0x18] sm:$0xff]
        %v215 = vld [vmem:[%s185 + $0x20] sm:$0xff]
        %v216 = vld [vmem:[%s185 + $0x28] sm:$0xff]
        %v217 = vld [vmem:[%s185 + $0x30] sm:$0xff]
        %v218 = vld [vmem:[%s185 + $0x38] sm:$0xff]
        %v219 = vld [vmem:[%s185 + $0x40] sm:$0xff]
        %v220 = vld [vmem:[%s185 + $0x48] sm:$0xff]
        %v221 = vld [vmem:[%s185 + $0x50] sm:$0xff]
        %v222 = vld [vmem:[%s185 + $0x58] sm:$0xff]
        %v223 = vld [vmem:[%s185 + $0x60] sm:$0xff]
        %v224 = vld [vmem:[%s185 + $0x68] sm:$0xff]
        %v225 = vld [vmem:[%s185 + $0x70] sm:$0xff]
        %v226 = vld [vmem:[%s185 + $0x78] sm:$0xff]
        %227 = vmatprep.subr.mxu0 0.0
        %228 = vmatpush1.msra.mxu0 %v226
        %229 = vmatprep.subr.mxu0 0.0
        %230 = vmatpush1.msra.mxu0 %v225
        %231 = vmatprep.subr.mxu0 0.0
        %232 = vmatpush1.msra.mxu0 %v224
        %233 = vmatprep.subr.mxu0 0.0
        %234 = vmatpush1.msra.mxu0 %v223
        %235 = vmatprep.subr.mxu0 0.0
        %236 = vmatpush1.msra.mxu0 %v222
        %237 = vmatprep.subr.mxu0 0.0
        %238 = vmatpush1.msra.mxu0 %v221
        %239 = vmatprep.subr.mxu0 0.0
        %240 = vmatpush1.msra.mxu0 %v220
        %241 = vmatprep.subr.mxu0 0.0
        %242 = vmatpush1.msra.mxu0 %v219
        %243 = vmatprep.subr.mxu0 0.0
        %244 = vmatpush1.msra.mxu0 %v218
        %245 = vmatprep.subr.mxu0 0.0
        %246 = vmatpush1.msra.mxu0 %v217
        %247 = vmatprep.subr.mxu0 0.0
        %248 = vmatpush1.msra.mxu0 %v216
        %249 = vmatprep.subr.mxu0 0.0
        %250 = vmatpush1.msra.mxu0 %v215
        %251 = vmatprep.subr.mxu0 0.0
        %252 = vmatpush1.msra.mxu0 %v214
        %253 = vmatprep.subr.mxu0 0.0
        %254 = vmatpush1.msra.mxu0 %v213
        %255 = vmatprep.subr.mxu0 0.0
        %256 = vmatpush1.msra.mxu0 %v212
        %257 = vmatprep.subr.mxu0 0.0
        %258 = vmatpush1.msra.mxu0 %v211
        %259 = vmatprep.subr.mxu0 0.0
        %260 = vmatpush2.msra.mxu0 0.0
        %261 = vmatprep.subr.mxu0 0.0
        %262 = vmatpush2.msra.mxu0 0.0
        %263 = vmatprep.subr.mxu0 0.0
        %264 = vmatpush2.msra.mxu0 0.0
        %265 = vmatprep.subr.mxu0 0.0
        %266 = vmatpush2.msra.mxu0 0.0
        %267 = vmatprep.subr.mxu0 0.0
        %268 = vmatpush2.msra.mxu0 0.0
        %269 = vmatprep.subr.mxu0 0.0
        %270 = vmatpush2.msra.mxu0 0.0
        %271 = vmatprep.subr.mxu0 0.0
        %272 = vmatpush2.msra.mxu0 0.0
        %273 = vmatprep.subr.mxu0 0.0
        %274 = vmatpush2.msra.mxu0 0.0
        %275 = vmatprep.subr.mxu0 0.0
        %276 = vmatpush2.msra.mxu0 0.0
        %277 = vmatprep.subr.mxu0 0.0
        %278 = vmatpush2.msra.mxu0 0.0
        %279 = vmatprep.subr.mxu0 0.0
        %280 = vmatpush2.msra.mxu0 0.0
        %281 = vmatprep.subr.mxu0 0.0
        %282 = vmatpush2.msra.mxu0 0.0
        %283 = vmatprep.subr.mxu0 0.0
        %284 = vmatpush2.msra.mxu0 0.0
        %285 = vmatprep.subr.mxu0 0.0
        %286 = vmatpush2.msra.mxu0 0.0
        %287 = vmatprep.subr.mxu0 0.0
        %288 = vmatpush2.msra.mxu0 0.0
        %289 = vmatprep.subr.mxu0 0.0
        %290 = vmatpush2.msra.mxu0 0.0
        %291 = vmatprep.mubr.f32.mxu0 0.0
        %292 = vmatmul.mubr.f32.gmra.mxu0 %v186
        %v293 = vpop.f32.mrf.mxu0
        %v294 = vadd.f32 0.0, %v293
        %v295 = vpop.f32.mrf.mxu0
        %296 = vmatprep.mubr.f32.mxu0 0.0
        %297 = vmatmul.mubr.f32.gmra.mxu0 %v187
        %v298 = vpop.f32.mrf.mxu0
        %v299 = vadd.f32 0.0, %v298
        %v300 = vpop.f32.mrf.mxu0
        %301 = vmatprep.mubr.f32.mxu0 0.0
        %302 = vmatmul.mubr.f32.gmra.mxu0 %v188
        %v303 = vpop.f32.mrf.mxu0
        %v304 = vadd.f32 0.0, %v303
        %v305 = vpop.f32.mrf.mxu0
        %306 = vmatprep.mubr.f32.mxu0 0.0
        %307 = vmatmul.mubr.f32.gmra.mxu0 %v189
        %v308 = vpop.f32.mrf.mxu0
        %v309 = vadd.f32 0.0, %v308
        %v310 = vpop.f32.mrf.mxu0
        %311 = vmatprep.mubr.f32.mxu0 0.0
        %312 = vmatmul.mubr.f32.gmra.mxu0 %v190
        %v313 = vpop.f32.mrf.mxu0
        %v314 = vadd.f32 0.0, %v313
        %v315 = vpop.f32.mrf.mxu0
        %316 = vmatprep.mubr.f32.mxu0 0.0
        %317 = vmatmul.mubr.f32.gmra.mxu0 %v191
        %v318 = vpop.f32.mrf.mxu0
        %v319 = vadd.f32 0.0, %v318
        %v320 = vpop.f32.mrf.mxu0
        %321 = vmatprep.mubr.f32.mxu0 0.0
        %322 = vmatmul.mubr.f32.gmra.mxu0 %v192
        %v323 = vpop.f32.mrf.mxu0
        %v324 = vadd.f32 0.0, %v323
        %v325 = vpop.f32.mrf.mxu0
        %326 = vmatprep.mubr.f32.mxu0 0.0
        %327 = vmatmul.mubr.f32.gmra.mxu0 %v193
        %v328 = vpop.f32.mrf.mxu0
        %v329 = vadd.f32 0.0, %v328
        %v330 = vpop.f32.mrf.mxu0
        %331 = vmatprep.mubr.f32.mxu0 0.0
        %332 = vmatmul.mubr.f32.gmra.mxu0 %v194
        %v333 = vpop.f32.mrf.mxu0
        %v334 = vadd.f32 0.0, %v333
        %v335 = vpop.f32.mrf.mxu0
        %336 = vmatprep.mubr.f32.mxu0 0.0
        %337 = vmatmul.mubr.f32.gmra.mxu0 %v195
        %v338 = vpop.f32.mrf.mxu0
        %v339 = vadd.f32 0.0, %v338
        %v340 = vpop.f32.mrf.mxu0
        %341 = vmatprep.mubr.f32.mxu0 0.0
        %342 = vmatmul.mubr.f32.gmra.mxu0 %v196
        %v343 = vpop.f32.mrf.mxu0
        %v344 = vadd.f32 0.0, %v343
        %v345 = vpop.f32.mrf.mxu0
        %346 = vmatprep.mubr.f32.mxu0 0.0
        %347 = vmatmul.mubr.f32.gmra.mxu0 %v197
        %v348 = vpop.f32.mrf.mxu0
        %v349 = vadd.f32 0.0, %v348
        %v350 = vpop.f32.mrf.mxu0
        %351 = vmatprep.mubr.f32.mxu0 0.0
        %352 = vmatmul.mubr.f32.gmra.mxu0 %v198
        %v353 = vpop.f32.mrf.mxu0
        %v354 = vadd.f32 0.0, %v353
        %v355 = vpop.f32.mrf.mxu0
        %356 = vmatprep.mubr.f32.mxu0 0.0
        %357 = vmatmul.mubr.f32.gmra.mxu0 %v199
        %v358 = vpop.f32.mrf.mxu0
        %v359 = vadd.f32 0.0, %v358
        %v360 = vpop.f32.mrf.mxu0
        %361 = vmatprep.mubr.f32.mxu0 0.0
        %362 = vmatmul.mubr.f32.gmra.mxu0 %v200
        %v363 = vpop.f32.mrf.mxu0
        %v364 = vadd.f32 0.0, %v363
        %v365 = vpop.f32.mrf.mxu0
        %366 = vmatprep.mubr.f32.mxu0 0.0
        %367 = vmatmul.mubr.f32.gmra.mxu0 %v201
        %v368 = vpop.f32.mrf.mxu0
        %v369 = vadd.f32 0.0, %v368
        %v370 = vpop.f32.mrf.mxu0
        %371 = vmatprep.mubr.f32.mxu0 0.0
        %372 = vmatmul.mubr.f32.gmra.mxu0 %v202
        %v373 = vpop.f32.mrf.mxu0
        %v374 = vadd.f32 0.0, %v373
        %v375 = vpop.f32.mrf.mxu0
        %376 = vmatprep.mubr.f32.mxu0 0.0
        %377 = vmatmul.mubr.f32.gmra.mxu0 %v203
        %v378 = vpop.f32.mrf.mxu0
        %v379 = vadd.f32 0.0, %v378
        %v380 = vpop.f32.mrf.mxu0
        %381 = vmatprep.mubr.f32.mxu0 0.0
        %382 = vmatmul.mubr.f32.gmra.mxu0 %v204
        %v383 = vpop.f32.mrf.mxu0
        %v384 = vadd.f32 0.0, %v383
        %v385 = vpop.f32.mrf.mxu0
        %386 = vmatprep.mubr.f32.mxu0 0.0
        %387 = vmatmul.mubr.f32.gmra.mxu0 %v205
        %v388 = vpop.f32.mrf.mxu0
        %v389 = vadd.f32 0.0, %v388
        %v390 = vpop.f32.mrf.mxu0
        %391 = vmatprep.mubr.f32.mxu0 0.0
        %392 = vmatmul.mubr.f32.gmra.mxu0 %v206
        %v393 = vpop.f32.mrf.mxu0
        %v394 = vadd.f32 0.0, %v393
        %v395 = vpop.f32.mrf.mxu0
        %396 = vmatprep.mubr.f32.mxu0 0.0
        %397 = vmatmul.mubr.f32.gmra.mxu0 %v207
        %v398 = vpop.f32.mrf.mxu0
        %v399 = vadd.f32 0.0, %v398
        %v400 = vpop.f32.mrf.mxu0
        %401 = vmatprep.mubr.f32.mxu0 0.0
        %402 = vmatmul.mubr.f32.gmra.mxu0 %v208
        %v403 = vpop.f32.mrf.mxu0
        %v404 = vadd.f32 0.0, %v403
        %v405 = vpop.f32.mrf.mxu0
        %406 = vmatprep.mubr.f32.mxu0 0.0
        %407 = vmatmul.mubr.f32.gmra.mxu0 %v209
        %v408 = vpop.f32.mrf.mxu0
        %v409 = vadd.f32 0.0, %v408
        %v410 = vpop.f32.mrf.mxu0
        %411 = vdwg.mxu0
        %vm412 = vcmask 195584
        %v414 = vsel %vm412, %v210, 0
        %416 = vmatprep.subr.mxu0 0.0
        %417 = vmatpush1.msra.mxu0 0.0
        %418 = vmatprep.subr.mxu0 0.0
        %419 = vmatpush1.msra.mxu0 0.0
        %420 = vmatprep.subr.mxu0 0.0
        %421 = vmatpush1.msra.mxu0 0.0
        %422 = vmatprep.subr.mxu0 0.0
        %423 = vmatpush1.msra.mxu0 0.0
        %424 = vmatprep.subr.mxu0 0.0
        %425 = vmatpush1.msra.mxu0 0.0
        %426 = vmatprep.subr.mxu0 0.0
        %427 = vmatpush1.msra.mxu0 0.0
        %428 = vmatprep.subr.mxu0 0.0
        %429 = vmatpush1.msra.mxu0 0.0
        %430 = vmatprep.subr.mxu0 0.0
        %431 = vmatpush1.msra.mxu0 0.0
        %432 = vmatprep.subr.mxu0 0.0
        %433 = vmatpush1.msra.mxu0 0.0
        %434 = vmatprep.subr.mxu0 0.0
        %435 = vmatpush1.msra.mxu0 0.0
        %436 = vmatprep.subr.mxu0 0.0
        %437 = vmatpush1.msra.mxu0 0.0
        %438 = vmatprep.subr.mxu0 0.0
        %439 = vmatpush1.msra.mxu0 0.0
        %440 = vmatprep.subr.mxu0 0.0
        %441 = vmatpush1.msra.mxu0 0.0
        %442 = vmatprep.subr.mxu0 0.0
        %443 = vmatpush1.msra.mxu0 %v304
        %444 = vmatprep.subr.mxu0 0.0
        %445 = vmatpush1.msra.mxu0 %v299
        %446 = vmatprep.subr.mxu0 0.0
        %447 = vmatpush1.msra.mxu0 %v294
        %448 = vmatprep.subr.mxu0 0.0
        %449 = vmatpush2.msra.mxu0 0.0
        %450 = vmatprep.subr.mxu0 0.0
        %451 = vmatpush2.msra.mxu0 0.0
        %452 = vmatprep.subr.mxu0 0.0
        %453 = vmatpush2.msra.mxu0 0.0
        %454 = vmatprep.subr.mxu0 0.0
        %455 = vmatpush2.msra.mxu0 0.0
        %456 = vmatprep.subr.mxu0 0.0
        %457 = vmatpush2.msra.mxu0 0.0
        %458 = vmatprep.subr.mxu0 0.0
        %459 = vmatpush2.msra.mxu0 0.0
        %460 = vmatprep.subr.mxu0 0.0
        %461 = vmatpush2.msra.mxu0 0.0
        %462 = vmatprep.subr.mxu0 0.0
        %463 = vmatpush2.msra.mxu0 0.0
        %464 = vmatprep.subr.mxu0 0.0
        %465 = vmatpush2.msra.mxu0 0.0
        %466 = vmatprep.subr.mxu0 0.0
        %467 = vmatpush2.msra.mxu0 0.0
        %468 = vmatprep.subr.mxu0 0.0
        %469 = vmatpush2.msra.mxu0 0.0
        %470 = vmatprep.subr.mxu0 0.0
        %471 = vmatpush2.msra.mxu0 0.0
        %472 = vmatprep.subr.mxu0 0.0
        %473 = vmatpush2.msra.mxu0 0.0
        %474 = vmatprep.subr.mxu0 0.0
        %475 = vmatpush2.msra.mxu0 0.0
        %476 = vmatprep.subr.mxu0 0.0
        %477 = vmatpush2.msra.mxu0 0.0
        %478 = vmatprep.subr.mxu0 0.0
        %479 = vmatpush2.msra.mxu0 0.0
        %480 = vmatprep.mubr.f32.mxu0 0.0
        %481 = vmatmul.mubr.f32.gmra.mxu0 %v414
        %v482 = vpop.f32.mrf.mxu0
        %v483 = vadd.f32 0.0, %v482
        %v484 = vpop.f32.mrf.mxu0
        %485 = vdwg.mxu0
        %vm486 = vcmask 64512
        %487 = vst.msk [vmem:[%s176] sm:$0xff] %vm486, %v483
        %488 = vmatprep.subr.mxu0 0.0
        %489 = vmatpush1.msra.mxu0 0.0
        %490 = vmatprep.subr.mxu0 0.0
        %491 = vmatpush1.msra.mxu0 0.0
        %492 = vmatprep.subr.mxu0 0.0
        %493 = vmatpush1.msra.mxu0 0.0
        %494 = vmatprep.subr.mxu0 0.0
        %495 = vmatpush1.msra.mxu0 0.0
        %496 = vmatprep.subr.mxu0 0.0
        %497 = vmatpush1.msra.mxu0 0.0
        %498 = vmatprep.subr.mxu0 0.0
        %499 = vmatpush1.msra.mxu0 0.0
        %500 = vmatprep.subr.mxu0 0.0
        %501 = vmatpush1.msra.mxu0 0.0
        %502 = vmatprep.subr.mxu0 0.0
        %503 = vmatpush1.msra.mxu0 0.0
        %504 = vmatprep.subr.mxu0 0.0
        %505 = vmatpush1.msra.mxu0 0.0
        %506 = vmatprep.subr.mxu0 0.0
        %507 = vmatpush1.msra.mxu0 0.0
        %508 = vmatprep.subr.mxu0 0.0
        %509 = vmatpush1.msra.mxu0 0.0
        %510 = vmatprep.subr.mxu0 0.0
        %511 = vmatpush1.msra.mxu0 0.0
        %512 = vmatprep.subr.mxu0 0.0
        %513 = vmatpush1.msra.mxu0 0.0
        %514 = vmatprep.subr.mxu0 0.0
        %515 = vmatpush1.msra.mxu0 %v319
        %516 = vmatprep.subr.mxu0 0.0
        %517 = vmatpush1.msra.mxu0 %v314
        %518 = vmatprep.subr.mxu0 0.0
        %519 = vmatpush1.msra.mxu0 %v309
        %520 = vmatprep.subr.mxu0 0.0
        %521 = vmatpush2.msra.mxu0 0.0
        %522 = vmatprep.subr.mxu0 0.0
        %523 = vmatpush2.msra.mxu0 0.0
        %524 = vmatprep.subr.mxu0 0.0
        %525 = vmatpush2.msra.mxu0 0.0
        %526 = vmatprep.subr.mxu0 0.0
        %527 = vmatpush2.msra.mxu0 0.0
        %528 = vmatprep.subr.mxu0 0.0
        %529 = vmatpush2.msra.mxu0 0.0
        %530 = vmatprep.subr.mxu0 0.0
        %531 = vmatpush2.msra.mxu0 0.0
        %532 = vmatprep.subr.mxu0 0.0
        %533 = vmatpush2.msra.mxu0 0.0
        %534 = vmatprep.subr.mxu0 0.0
        %535 = vmatpush2.msra.mxu0 0.0
        %536 = vmatprep.subr.mxu0 0.0
        %537 = vmatpush2.msra.mxu0 0.0
        %538 = vmatprep.subr.mxu0 0.0
        %539 = vmatpush2.msra.mxu0 0.0
        %540 = vmatprep.subr.mxu0 0.0
        %541 = vmatpush2.msra.mxu0 0.0
        %542 = vmatprep.subr.mxu0 0.0
        %543 = vmatpush2.msra.mxu0 0.0
        %544 = vmatprep.subr.mxu0 0.0
        %545 = vmatpush2.msra.mxu0 0.0
        %546 = vmatprep.subr.mxu0 0.0
        %547 = vmatpush2.msra.mxu0 0.0
        %548 = vmatprep.subr.mxu0 0.0
        %549 = vmatpush2.msra.mxu0 0.0
        %550 = vmatprep.subr.mxu0 0.0
        %551 = vmatpush2.msra.mxu0 0.0
        %552 = vmatprep.mubr.f32.mxu0 0.0
        %553 = vmatmul.mubr.f32.gmra.mxu0 %v414
        %v554 = vpop.f32.mrf.mxu0
        %v555 = vadd.f32 0.0, %v554
        %v556 = vpop.f32.mrf.mxu0
        %557 = vdwg.mxu0
        %s558 = scalar_lea.vmem %s176, 8 [#allocation2]
        %559 = vst.msk [vmem:[%s558] sm:$0xff] %vm486, %v555
        %560 = vmatprep.subr.mxu0 0.0
        %561 = vmatpush1.msra.mxu0 0.0
        %562 = vmatprep.subr.mxu0 0.0
        %563 = vmatpush1.msra.mxu0 0.0
        %564 = vmatprep.subr.mxu0 0.0
        %565 = vmatpush1.msra.mxu0 0.0
        %566 = vmatprep.subr.mxu0 0.0
        %567 = vmatpush1.msra.mxu0 0.0
        %568 = vmatprep.subr.mxu0 0.0
        %569 = vmatpush1.msra.mxu0 0.0
        %570 = vmatprep.subr.mxu0 0.0
        %571 = vmatpush1.msra.mxu0 0.0
        %572 = vmatprep.subr.mxu0 0.0
        %573 = vmatpush1.msra.mxu0 0.0
        %574 = vmatprep.subr.mxu0 0.0
        %575 = vmatpush1.msra.mxu0 0.0
        %576 = vmatprep.subr.mxu0 0.0
        %577 = vmatpush1.msra.mxu0 0.0
        %578 = vmatprep.subr.mxu0 0.0
        %579 = vmatpush1.msra.mxu0 0.0
        %580 = vmatprep.subr.mxu0 0.0
        %581 = vmatpush1.msra.mxu0 0.0
        %582 = vmatprep.subr.mxu0 0.0
        %583 = vmatpush1.msra.mxu0 0.0
        %584 = vmatprep.subr.mxu0 0.0
        %585 = vmatpush1.msra.mxu0 0.0
        %586 = vmatprep.subr.mxu0 0.0
        %587 = vmatpush1.msra.mxu0 %v334
        %588 = vmatprep.subr.mxu0 0.0
        %589 = vmatpush1.msra.mxu0 %v329
        %590 = vmatprep.subr.mxu0 0.0
        %591 = vmatpush1.msra.mxu0 %v324
        %592 = vmatprep.subr.mxu0 0.0
        %593 = vmatpush2.msra.mxu0 0.0
        %594 = vmatprep.subr.mxu0 0.0
        %595 = vmatpush2.msra.mxu0 0.0
        %596 = vmatprep.subr.mxu0 0.0
        %597 = vmatpush2.msra.mxu0 0.0
        %598 = vmatprep.subr.mxu0 0.0
        %599 = vmatpush2.msra.mxu0 0.0
        %600 = vmatprep.subr.mxu0 0.0
        %601 = vmatpush2.msra.mxu0 0.0
        %602 = vmatprep.subr.mxu0 0.0
        %603 = vmatpush2.msra.mxu0 0.0
        %604 = vmatprep.subr.mxu0 0.0
        %605 = vmatpush2.msra.mxu0 0.0
        %606 = vmatprep.subr.mxu0 0.0
        %607 = vmatpush2.msra.mxu0 0.0
        %608 = vmatprep.subr.mxu0 0.0
        %609 = vmatpush2.msra.mxu0 0.0
        %610 = vmatprep.subr.mxu0 0.0
        %611 = vmatpush2.msra.mxu0 0.0
        %612 = vmatprep.subr.mxu0 0.0
        %613 = vmatpush2.msra.mxu0 0.0
        %614 = vmatprep.subr.mxu0 0.0
        %615 = vmatpush2.msra.mxu0 0.0
        %616 = vmatprep.subr.mxu0 0.0
        %617 = vmatpush2.msra.mxu0 0.0
        %618 = vmatprep.subr.mxu0 0.0
        %619 = vmatpush2.msra.mxu0 0.0
        %620 = vmatprep.subr.mxu0 0.0
        %621 = vmatpush2.msra.mxu0 0.0
        %622 = vmatprep.subr.mxu0 0.0
        %623 = vmatpush2.msra.mxu0 0.0
        %624 = vmatprep.mubr.f32.mxu0 0.0
        %625 = vmatmul.mubr.f32.gmra.mxu0 %v414
        %v626 = vpop.f32.mrf.mxu0
        %v627 = vadd.f32 0.0, %v626
        %v628 = vpop.f32.mrf.mxu0
        %629 = vdwg.mxu0
        %s630 = scalar_lea.vmem %s176, 16 [#allocation2]
        %631 = vst.msk [vmem:[%s630] sm:$0xff] %vm486, %v627
        %632 = vmatprep.subr.mxu0 0.0
        %633 = vmatpush1.msra.mxu0 0.0
        %634 = vmatprep.subr.mxu0 0.0
        %635 = vmatpush1.msra.mxu0 0.0
        %636 = vmatprep.subr.mxu0 0.0
        %637 = vmatpush1.msra.mxu0 0.0
        %638 = vmatprep.subr.mxu0 0.0
        %639 = vmatpush1.msra.mxu0 0.0
        %640 = vmatprep.subr.mxu0 0.0
        %641 = vmatpush1.msra.mxu0 0.0
        %642 = vmatprep.subr.mxu0 0.0
        %643 = vmatpush1.msra.mxu0 0.0
        %644 = vmatprep.subr.mxu0 0.0
        %645 = vmatpush1.msra.mxu0 0.0
        %646 = vmatprep.subr.mxu0 0.0
        %647 = vmatpush1.msra.mxu0 0.0
        %648 = vmatprep.subr.mxu0 0.0
        %649 = vmatpush1.msra.mxu0 0.0
        %650 = vmatprep.subr.mxu0 0.0
        %651 = vmatpush1.msra.mxu0 0.0
        %652 = vmatprep.subr.mxu0 0.0
        %653 = vmatpush1.msra.mxu0 0.0
        %654 = vmatprep.subr.mxu0 0.0
        %655 = vmatpush1.msra.mxu0 0.0
        %656 = vmatprep.subr.mxu0 0.0
        %657 = vmatpush1.msra.mxu0 0.0
        %658 = vmatprep.subr.mxu0 0.0
        %659 = vmatpush1.msra.mxu0 %v349
        %660 = vmatprep.subr.mxu0 0.0
        %661 = vmatpush1.msra.mxu0 %v344
        %662 = vmatprep.subr.mxu0 0.0
        %663 = vmatpush1.msra.mxu0 %v339
        %664 = vmatprep.subr.mxu0 0.0
        %665 = vmatpush2.msra.mxu0 0.0
        %666 = vmatprep.subr.mxu0 0.0
        %667 = vmatpush2.msra.mxu0 0.0
        %668 = vmatprep.subr.mxu0 0.0
        %669 = vmatpush2.msra.mxu0 0.0
        %670 = vmatprep.subr.mxu0 0.0
        %671 = vmatpush2.msra.mxu0 0.0
        %672 = vmatprep.subr.mxu0 0.0
        %673 = vmatpush2.msra.mxu0 0.0
        %674 = vmatprep.subr.mxu0 0.0
        %675 = vmatpush2.msra.mxu0 0.0
        %676 = vmatprep.subr.mxu0 0.0
        %677 = vmatpush2.msra.mxu0 0.0
        %678 = vmatprep.subr.mxu0 0.0
        %679 = vmatpush2.msra.mxu0 0.0
        %680 = vmatprep.subr.mxu0 0.0
        %681 = vmatpush2.msra.mxu0 0.0
        %682 = vmatprep.subr.mxu0 0.0
        %683 = vmatpush2.msra.mxu0 0.0
        %684 = vmatprep.subr.mxu0 0.0
        %685 = vmatpush2.msra.mxu0 0.0
        %686 = vmatprep.subr.mxu0 0.0
        %687 = vmatpush2.msra.mxu0 0.0
        %688 = vmatprep.subr.mxu0 0.0
        %689 = vmatpush2.msra.mxu0 0.0
        %690 = vmatprep.subr.mxu0 0.0
        %691 = vmatpush2.msra.mxu0 0.0
        %692 = vmatprep.subr.mxu0 0.0
        %693 = vmatpush2.msra.mxu0 0.0
        %694 = vmatprep.subr.mxu0 0.0
        %695 = vmatpush2.msra.mxu0 0.0
        %696 = vmatprep.mubr.f32.mxu0 0.0
        %697 = vmatmul.mubr.f32.gmra.mxu0 %v414
        %v698 = vpop.f32.mrf.mxu0
        %v699 = vadd.f32 0.0, %v698
        %v700 = vpop.f32.mrf.mxu0
        %701 = vdwg.mxu0
        %s702 = scalar_lea.vmem %s176, 24 [#allocation2]
        %703 = vst.msk [vmem:[%s702] sm:$0xff] %vm486, %v699
        %704 = vmatprep.subr.mxu0 0.0
        %705 = vmatpush1.msra.mxu0 0.0
        %706 = vmatprep.subr.mxu0 0.0
        %707 = vmatpush1.msra.mxu0 0.0
        %708 = vmatprep.subr.mxu0 0.0
        %709 = vmatpush1.msra.mxu0 0.0
        %710 = vmatprep.subr.mxu0 0.0
        %711 = vmatpush1.msra.mxu0 0.0
        %712 = vmatprep.subr.mxu0 0.0
        %713 = vmatpush1.msra.mxu0 0.0
        %714 = vmatprep.subr.mxu0 0.0
        %715 = vmatpush1.msra.mxu0 0.0
        %716 = vmatprep.subr.mxu0 0.0
        %717 = vmatpush1.msra.mxu0 0.0
        %718 = vmatprep.subr.mxu0 0.0
        %719 = vmatpush1.msra.mxu0 0.0
        %720 = vmatprep.subr.mxu0 0.0
        %721 = vmatpush1.msra.mxu0 0.0
        %722 = vmatprep.subr.mxu0 0.0
        %723 = vmatpush1.msra.mxu0 0.0
        %724 = vmatprep.subr.mxu0 0.0
        %725 = vmatpush1.msra.mxu0 0.0
        %726 = vmatprep.subr.mxu0 0.0
        %727 = vmatpush1.msra.mxu0 0.0
        %728 = vmatprep.subr.mxu0 0.0
        %729 = vmatpush1.msra.mxu0 0.0
        %730 = vmatprep.subr.mxu0 0.0
        %731 = vmatpush1.msra.mxu0 %v364
        %732 = vmatprep.subr.mxu0 0.0
        %733 = vmatpush1.msra.mxu0 %v359
        %734 = vmatprep.subr.mxu0 0.0
        %735 = vmatpush1.msra.mxu0 %v354
        %736 = vmatprep.subr.mxu0 0.0
        %737 = vmatpush2.msra.mxu0 0.0
        %738 = vmatprep.subr.mxu0 0.0
        %739 = vmatpush2.msra.mxu0 0.0
        %740 = vmatprep.subr.mxu0 0.0
        %741 = vmatpush2.msra.mxu0 0.0
        %742 = vmatprep.subr.mxu0 0.0
        %743 = vmatpush2.msra.mxu0 0.0
        %744 = vmatprep.subr.mxu0 0.0
        %745 = vmatpush2.msra.mxu0 0.0
        %746 = vmatprep.subr.mxu0 0.0
        %747 = vmatpush2.msra.mxu0 0.0
        %748 = vmatprep.subr.mxu0 0.0
        %749 = vmatpush2.msra.mxu0 0.0
        %750 = vmatprep.subr.mxu0 0.0
        %751 = vmatpush2.msra.mxu0 0.0
        %752 = vmatprep.subr.mxu0 0.0
        %753 = vmatpush2.msra.mxu0 0.0
        %754 = vmatprep.subr.mxu0 0.0
        %755 = vmatpush2.msra.mxu0 0.0
        %756 = vmatprep.subr.mxu0 0.0
        %757 = vmatpush2.msra.mxu0 0.0
        %758 = vmatprep.subr.mxu0 0.0
        %759 = vmatpush2.msra.mxu0 0.0
        %760 = vmatprep.subr.mxu0 0.0
        %761 = vmatpush2.msra.mxu0 0.0
        %762 = vmatprep.subr.mxu0 0.0
        %763 = vmatpush2.msra.mxu0 0.0
        %764 = vmatprep.subr.mxu0 0.0
        %765 = vmatpush2.msra.mxu0 0.0
        %766 = vmatprep.subr.mxu0 0.0
        %767 = vmatpush2.msra.mxu0 0.0
        %768 = vmatprep.mubr.f32.mxu0 0.0
        %769 = vmatmul.mubr.f32.gmra.mxu0 %v414
        %v770 = vpop.f32.mrf.mxu0
        %v771 = vadd.f32 0.0, %v770
        %v772 = vpop.f32.mrf.mxu0
        %773 = vdwg.mxu0
        %s774 = scalar_lea.vmem %s176, 32 [#allocation2]
        %775 = vst.msk [vmem:[%s774] sm:$0xff] %vm486, %v771
        %776 = vmatprep.subr.mxu0 0.0
        %777 = vmatpush1.msra.mxu0 0.0
        %778 = vmatprep.subr.mxu0 0.0
        %779 = vmatpush1.msra.mxu0 0.0
        %780 = vmatprep.subr.mxu0 0.0
        %781 = vmatpush1.msra.mxu0 0.0
        %782 = vmatprep.subr.mxu0 0.0
        %783 = vmatpush1.msra.mxu0 0.0
        %784 = vmatprep.subr.mxu0 0.0
        %785 = vmatpush1.msra.mxu0 0.0
        %786 = vmatprep.subr.mxu0 0.0
        %787 = vmatpush1.msra.mxu0 0.0
        %788 = vmatprep.subr.mxu0 0.0
        %789 = vmatpush1.msra.mxu0 0.0
        %790 = vmatprep.subr.mxu0 0.0
        %791 = vmatpush1.msra.mxu0 0.0
        %792 = vmatprep.subr.mxu0 0.0
        %793 = vmatpush1.msra.mxu0 0.0
        %794 = vmatprep.subr.mxu0 0.0
        %795 = vmatpush1.msra.mxu0 0.0
        %796 = vmatprep.subr.mxu0 0.0
        %797 = vmatpush1.msra.mxu0 0.0
        %798 = vmatprep.subr.mxu0 0.0
        %799 = vmatpush1.msra.mxu0 0.0
        %800 = vmatprep.subr.mxu0 0.0
        %801 = vmatpush1.msra.mxu0 0.0
        %802 = vmatprep.subr.mxu0 0.0
        %803 = vmatpush1.msra.mxu0 %v379
        %804 = vmatprep.subr.mxu0 0.0
        %805 = vmatpush1.msra.mxu0 %v374
        %806 = vmatprep.subr.mxu0 0.0
        %807 = vmatpush1.msra.mxu0 %v369
        %808 = vmatprep.subr.mxu0 0.0
        %809 = vmatpush2.msra.mxu0 0.0
        %810 = vmatprep.subr.mxu0 0.0
        %811 = vmatpush2.msra.mxu0 0.0
        %812 = vmatprep.subr.mxu0 0.0
        %813 = vmatpush2.msra.mxu0 0.0
        %814 = vmatprep.subr.mxu0 0.0
        %815 = vmatpush2.msra.mxu0 0.0
        %816 = vmatprep.subr.mxu0 0.0
        %817 = vmatpush2.msra.mxu0 0.0
        %818 = vmatprep.subr.mxu0 0.0
        %819 = vmatpush2.msra.mxu0 0.0
        %820 = vmatprep.subr.mxu0 0.0
        %821 = vmatpush2.msra.mxu0 0.0
        %822 = vmatprep.subr.mxu0 0.0
        %823 = vmatpush2.msra.mxu0 0.0
        %824 = vmatprep.subr.mxu0 0.0
        %825 = vmatpush2.msra.mxu0 0.0
        %826 = vmatprep.subr.mxu0 0.0
        %827 = vmatpush2.msra.mxu0 0.0
        %828 = vmatprep.subr.mxu0 0.0
        %829 = vmatpush2.msra.mxu0 0.0
        %830 = vmatprep.subr.mxu0 0.0
        %831 = vmatpush2.msra.mxu0 0.0
        %832 = vmatprep.subr.mxu0 0.0
        %833 = vmatpush2.msra.mxu0 0.0
        %834 = vmatprep.subr.mxu0 0.0
        %835 = vmatpush2.msra.mxu0 0.0
        %836 = vmatprep.subr.mxu0 0.0
        %837 = vmatpush2.msra.mxu0 0.0
        %838 = vmatprep.subr.mxu0 0.0
        %839 = vmatpush2.msra.mxu0 0.0
        %840 = vmatprep.mubr.f32.mxu0 0.0
        %841 = vmatmul.mubr.f32.gmra.mxu0 %v414
        %v842 = vpop.f32.mrf.mxu0
        %v843 = vadd.f32 0.0, %v842
        %v844 = vpop.f32.mrf.mxu0
        %845 = vdwg.mxu0
        %s846 = scalar_lea.vmem %s176, 40 [#allocation2]
        %847 = vst.msk [vmem:[%s846] sm:$0xff] %vm486, %v843
        %848 = vmatprep.subr.mxu0 0.0
        %849 = vmatpush1.msra.mxu0 0.0
        %850 = vmatprep.subr.mxu0 0.0
        %851 = vmatpush1.msra.mxu0 0.0
        %852 = vmatprep.subr.mxu0 0.0
        %853 = vmatpush1.msra.mxu0 0.0
        %854 = vmatprep.subr.mxu0 0.0
        %855 = vmatpush1.msra.mxu0 0.0
        %856 = vmatprep.subr.mxu0 0.0
        %857 = vmatpush1.msra.mxu0 0.0
        %858 = vmatprep.subr.mxu0 0.0
        %859 = vmatpush1.msra.mxu0 0.0
        %860 = vmatprep.subr.mxu0 0.0
        %861 = vmatpush1.msra.mxu0 0.0
        %862 = vmatprep.subr.mxu0 0.0
        %863 = vmatpush1.msra.mxu0 0.0
        %864 = vmatprep.subr.mxu0 0.0
        %865 = vmatpush1.msra.mxu0 0.0
        %866 = vmatprep.subr.mxu0 0.0
        %867 = vmatpush1.msra.mxu0 0.0
        %868 = vmatprep.subr.mxu0 0.0
        %869 = vmatpush1.msra.mxu0 0.0
        %870 = vmatprep.subr.mxu0 0.0
        %871 = vmatpush1.msra.mxu0 0.0
        %872 = vmatprep.subr.mxu0 0.0
        %873 = vmatpush1.msra.mxu0 0.0
        %874 = vmatprep.subr.mxu0 0.0
        %875 = vmatpush1.msra.mxu0 %v394
        %876 = vmatprep.subr.mxu0 0.0
        %877 = vmatpush1.msra.mxu0 %v389
        %878 = vmatprep.subr.mxu0 0.0
        %879 = vmatpush1.msra.mxu0 %v384
        %880 = vmatprep.subr.mxu0 0.0
        %881 = vmatpush2.msra.mxu0 0.0
        %882 = vmatprep.subr.mxu0 0.0
        %883 = vmatpush2.msra.mxu0 0.0
        %884 = vmatprep.subr.mxu0 0.0
        %885 = vmatpush2.msra.mxu0 0.0
        %886 = vmatprep.subr.mxu0 0.0
        %887 = vmatpush2.msra.mxu0 0.0
        %888 = vmatprep.subr.mxu0 0.0
        %889 = vmatpush2.msra.mxu0 0.0
        %890 = vmatprep.subr.mxu0 0.0
        %891 = vmatpush2.msra.mxu0 0.0
        %892 = vmatprep.subr.mxu0 0.0
        %893 = vmatpush2.msra.mxu0 0.0
        %894 = vmatprep.subr.mxu0 0.0
        %895 = vmatpush2.msra.mxu0 0.0
        %896 = vmatprep.subr.mxu0 0.0
        %897 = vmatpush2.msra.mxu0 0.0
        %898 = vmatprep.subr.mxu0 0.0
        %899 = vmatpush2.msra.mxu0 0.0
        %900 = vmatprep.subr.mxu0 0.0
        %901 = vmatpush2.msra.mxu0 0.0
        %902 = vmatprep.subr.mxu0 0.0
        %903 = vmatpush2.msra.mxu0 0.0
        %904 = vmatprep.subr.mxu0 0.0
        %905 = vmatpush2.msra.mxu0 0.0
        %906 = vmatprep.subr.mxu0 0.0
        %907 = vmatpush2.msra.mxu0 0.0
        %908 = vmatprep.subr.mxu0 0.0
        %909 = vmatpush2.msra.mxu0 0.0
        %910 = vmatprep.subr.mxu0 0.0
        %911 = vmatpush2.msra.mxu0 0.0
        %912 = vmatprep.mubr.f32.mxu0 0.0
        %913 = vmatmul.mubr.f32.gmra.mxu0 %v414
        %v914 = vpop.f32.mrf.mxu0
        %v915 = vadd.f32 0.0, %v914
        %v916 = vpop.f32.mrf.mxu0
        %917 = vdwg.mxu0
        %s918 = scalar_lea.vmem %s176, 48 [#allocation2]
        %919 = vst.msk [vmem:[%s918] sm:$0xff] %vm486, %v915
        %920 = vmatprep.subr.mxu0 0.0
        %921 = vmatpush1.msra.mxu0 0.0
        %922 = vmatprep.subr.mxu0 0.0
        %923 = vmatpush1.msra.mxu0 0.0
        %924 = vmatprep.subr.mxu0 0.0
        %925 = vmatpush1.msra.mxu0 0.0
        %926 = vmatprep.subr.mxu0 0.0
        %927 = vmatpush1.msra.mxu0 0.0
        %928 = vmatprep.subr.mxu0 0.0
        %929 = vmatpush1.msra.mxu0 0.0
        %930 = vmatprep.subr.mxu0 0.0
        %931 = vmatpush1.msra.mxu0 0.0
        %932 = vmatprep.subr.mxu0 0.0
        %933 = vmatpush1.msra.mxu0 0.0
        %934 = vmatprep.subr.mxu0 0.0
        %935 = vmatpush1.msra.mxu0 0.0
        %936 = vmatprep.subr.mxu0 0.0
        %937 = vmatpush1.msra.mxu0 0.0
        %938 = vmatprep.subr.mxu0 0.0
        %939 = vmatpush1.msra.mxu0 0.0
        %940 = vmatprep.subr.mxu0 0.0
        %941 = vmatpush1.msra.mxu0 0.0
        %942 = vmatprep.subr.mxu0 0.0
        %943 = vmatpush1.msra.mxu0 0.0
        %944 = vmatprep.subr.mxu0 0.0
        %945 = vmatpush1.msra.mxu0 0.0
        %946 = vmatprep.subr.mxu0 0.0
        %947 = vmatpush1.msra.mxu0 %v409
        %948 = vmatprep.subr.mxu0 0.0
        %949 = vmatpush1.msra.mxu0 %v404
        %950 = vmatprep.subr.mxu0 0.0
        %951 = vmatpush1.msra.mxu0 %v399
        %952 = vmatprep.subr.mxu0 0.0
        %953 = vmatpush2.msra.mxu0 0.0
        %954 = vmatprep.subr.mxu0 0.0
        %955 = vmatpush2.msra.mxu0 0.0
        %956 = vmatprep.subr.mxu0 0.0
        %957 = vmatpush2.msra.mxu0 0.0
        %958 = vmatprep.subr.mxu0 0.0
        %959 = vmatpush2.msra.mxu0 0.0
        %960 = vmatprep.subr.mxu0 0.0
        %961 = vmatpush2.msra.mxu0 0.0
        %962 = vmatprep.subr.mxu0 0.0
        %963 = vmatpush2.msra.mxu0 0.0
        %964 = vmatprep.subr.mxu0 0.0
        %965 = vmatpush2.msra.mxu0 0.0
        %966 = vmatprep.subr.mxu0 0.0
        %967 = vmatpush2.msra.mxu0 0.0
        %968 = vmatprep.subr.mxu0 0.0
        %969 = vmatpush2.msra.mxu0 0.0
        %970 = vmatprep.subr.mxu0 0.0
        %971 = vmatpush2.msra.mxu0 0.0
        %972 = vmatprep.subr.mxu0 0.0
        %973 = vmatpush2.msra.mxu0 0.0
        %974 = vmatprep.subr.mxu0 0.0
        %975 = vmatpush2.msra.mxu0 0.0
        %976 = vmatprep.subr.mxu0 0.0
        %977 = vmatpush2.msra.mxu0 0.0
        %978 = vmatprep.subr.mxu0 0.0
        %979 = vmatpush2.msra.mxu0 0.0
        %980 = vmatprep.subr.mxu0 0.0
        %981 = vmatpush2.msra.mxu0 0.0
        %982 = vmatprep.subr.mxu0 0.0
        %983 = vmatpush2.msra.mxu0 0.0
        %984 = vmatprep.mubr.f32.mxu0 0.0
        %985 = vmatmul.mubr.f32.gmra.mxu0 %v414
        %v986 = vpop.f32.mrf.mxu0
        %v987 = vadd.f32 0.0, %v986
        %v988 = vpop.f32.mrf.mxu0
        %989 = vdwg.mxu0
        %s990 = scalar_lea.vmem %s176, 56 [#allocation2]
        %991 = vst.msk [vmem:[%s990] sm:$0xff] %vm486, %v987
        %s992 = sand.u32 %s98, 1
        %s993 = scalar_lea.sflag [#allocation3], %s992
        %s994 = sand.u32 %s98, 1
        %s995 = smul.addr %s994, 64
        %s996 = scalar_lea.vmem [#allocation2], %s995
        // Predicated region
        $region33: #{tpu_custom_call.1} parent=31 // pred_check
          %p997 = pneg %p108
        $region34: #{tpu_custom_call.1} parent=31 // pred_check_branch
          %999 = sbr.rel (%p997) target = $region36
        $region35: #{tpu_custom_call.1} parent=31 // pred_region
          %s1001 = ssub.s32 1024, 1024
          %1002 = vsyncadd %s993, %s1001
          %s1003 = smul.addr %s17, 8
          %s1004 = smul.addr %s1003, 128
          %s1005 = scalar_lea.hbm %s3, %s1004
          %s1006 = sshll.u32 %s996, 4
          %s1007 = int_to_ptr.vmem [resolvable:$true] %s1006
          %1012 = dma.vmem_to_hbm [thread:$0]  %s1007, 1024, %s1005, %s993, 128, 128, 8
        $region36: #{tpu_custom_call.1} parent=31 // pred_fallthru
          _
      $region32: #{tpu_custom_call.1} parent=5 // pred_fallthru
        _
      %p1013 = scmp.le.s32.totalorder 2, %s12
      // Predicated region
      $region37: #{tpu_custom_call.1} parent=5 // pred_check
        %p1014 = pneg %p1013
      $region38: #{tpu_custom_call.1} parent=5 // pred_check_branch
        %1016 = sbr.rel (%p1014) target = $region40
      $region39: #{tpu_custom_call.1} parent=5 // pred_region
        %s1017 = ssub.s32 %s12, 2
        // Predicated region
        $region41: #{tpu_custom_call.1} parent=39 // pred_check
          %p1018 = pneg %p114
        $region42: #{tpu_custom_call.1} parent=39 // pred_check_branch
          %1020 = sbr.rel (%p1018) target = $region44
        $region43: #{tpu_custom_call.1} parent=39 // pred_region
          %s1021 = sand.u32 %s99, 1
          %s1022 = scalar_lea.sflag [#allocation3], %s1021
          %s1023 = sand.u32 %s99, 1
          %s1024 = smul.addr %s1023, 64
          %s1025 = scalar_lea.vmem [#allocation2], %s1024
          %1026 = dma.done %s1022, 1024
        $region44: #{tpu_custom_call.1} parent=39 // pred_fallthru
          _
      $region40: #{tpu_custom_call.1} parent=5 // pred_fallthru
        _
    $region6: #{tpu_custom_call.1} parent=1 // loop_footer
      %s16 = sadd.s32 1, %s12
    $region7: #{tpu_custom_call.1} parent=1 // loop_footer_branch
      %11 = sbr.rel target = $region3
    $region8: #{tpu_custom_call.1} parent=1 // loop_exit
      _
    %1027 = vsyncpa [#allocation3], 1
    %s1028 = scalar_lea.sflag [#allocation3], 1
    %1029 = vsyncpa %s1028, 1

</llo_original>
